<compile_context>
chip_gen: v7x
topology: tpu7x:2x2x1
jax: 0.10.0
libtpu: 0.0.40
codegen_flags: <defaults>
</compile_context>

<pallas_src>
import jax
import jax.numpy as jnp
from jax.experimental import pallas as pl
from jax.experimental.pallas import tpu as pltpu

EPS = 1e-5
VMEM_LIMIT_BYTES = 32 * 1024 * 1024  # explicit, safe on v5e/v6e/v7x (usage is ~few MB)


def _round_up(a, b):
    return ((a + b - 1) // b) * b


def stats_kernel(x_ref, sum_ref, sq_ref):
    """Accumulate per-row sum and sum-of-squares across HW tiles.

    x_ref:   (row_tile, hw_tile) block of the zero-padded (N*C, HW) slab
    sum_ref: (row_tile, 128) partial lane-wise accumulator (resident across hw axis)
    sq_ref:  (row_tile, 128) partial lane-wise accumulator
    """
    # hw axis (pl.program_id(1)) is the reduction axis (last in grid, "arbitrary")
    @pl.when(pl.program_id(1) == 0)
    def _():
        sum_ref[...] = jnp.zeros_like(sum_ref)
        sq_ref[...] = jnp.zeros_like(sq_ref)

    x = x_ref[...].astype(jnp.float32)
    s = sum_ref[...]
    q = sq_ref[...]
    # Accumulate 128-lane groups with pure VPU adds (static, lane-aligned slices);
    # the single cross-lane (XLU) reduce happens once, outside, on the tiny partials.
    for g in range(x.shape[1] // 128):
        xg = x[:, g * 128:(g + 1) * 128]
        s = s + xg
        q = q + xg * xg
    sum_ref[...] = s
    sq_ref[...] = q


def apply_kernel(x_ref, scale_ref, shift_ref, out_ref):
    """out = x * scale + shift with per-row scale/shift broadcast along lanes."""
    x = x_ref[...].astype(jnp.float32)
    out_ref[...] = (x * scale_ref[...] + shift_ref[...]).astype(out_ref.dtype)


def conditional_batch_norm_2d(x, condition, wg, bg, wb, bb):
    """x: (N, C, H, W) NCHW, condition: (N, C). Returns (N, C, H, W)."""
    N, C, H, W = x.shape
    HW = H * W
    R = N * C

    # Tile selection: lane tile multiple of 128 (<=512), row tile multiple of 8 (<=256).
    hw_tile = min(_round_up(HW, 128), 512)
    HWp = _round_up(HW, hw_tile)
    row_tile = min(_round_up(R, 8), 256)
    Rp = _round_up(R, row_tile)

    # Contiguous reshape + zero padding (zeros contribute nothing to sum / sumsq).
    x2 = x.reshape(R, HW)
    x2p = jnp.pad(x2, ((0, Rp - R), (0, HWp - HW)))

    grid = (Rp // row_tile, HWp // hw_tile)

    # ---------------- Pass 1: per-row sum / sumsq (one traversal of x) -------------
    sums, sqs = pl.pallas_call(
        stats_kernel,
        out_shape=(jax.ShapeDtypeStruct((Rp, 128), jnp.float32),
                   jax.ShapeDtypeStruct((Rp, 128), jnp.float32)),
        grid=grid,
        in_specs=[pl.BlockSpec((row_tile, hw_tile), lambda i, j: (i, j))],
        out_specs=(pl.BlockSpec((row_tile, 128), lambda i, j: (i, 0)),
                   pl.BlockSpec((row_tile, 128), lambda i, j: (i, 0))),
        compiler_params=pltpu.CompilerParams(
            dimension_semantics=("parallel", "arbitrary"),
            vmem_limit_bytes=VMEM_LIMIT_BYTES),
    )(x2p)

    # -------- Tiny per-channel / per-(N,C) glue in plain JAX (negligible cost) -----
    row_sum = jnp.sum(sums[:R], axis=1)            # (R,) final cross-lane reduce
    row_sq = jnp.sum(sqs[:R], axis=1)              # (R,)
    ch_sum = row_sum.reshape(N, C).sum(axis=0)     # (C,) per-channel over batch
    ch_sq = row_sq.reshape(N, C).sum(axis=0)       # (C,)
    count = jnp.float32(N * HW)
    mean = ch_sum / count
    # One-pass biased variance E[x^2] - mean^2 (f32 accumulation; clamp + eps guard
    # against cancellation when |mean| >> std).
    var = jnp.maximum(ch_sq / count - mean * mean, 0.0)
    inv = jax.lax.rsqrt(var + EPS)                 # (C,)

    # gamma/beta: single fused (C, 2C) matmul, computed once (hoisted out of tiles).
    wgb = jnp.concatenate([wg.T, wb.T], axis=1).astype(jnp.float32)   # (C, 2C)
    bgb = jnp.concatenate([bg, bb], axis=0).astype(jnp.float32)       # (2C,)
    gb = condition.astype(jnp.float32) @ wgb + bgb                    # (N, 2C)
    gamma = gb[:, :C]
    beta = gb[:, C:]

    # Fold normalize + conditional affine into per-(N,C) scale/shift.
    scale_nc = inv[None, :] * (1.0 + gamma)        # (N, C)
    shift_nc = beta - mean[None, :] * scale_nc     # (N, C)
    scale = jnp.pad(scale_nc.reshape(R, 1), ((0, Rp - R), (0, 0)))
    shift = jnp.pad(shift_nc.reshape(R, 1), ((0, Rp - R), (0, 0)))

    # ---------------- Pass 2: apply (one read + one write of x) --------------------
    out2p = pl.pallas_call(
        apply_kernel,
        out_shape=jax.ShapeDtypeStruct((Rp, HWp), x.dtype),
        grid=grid,
        in_specs=[pl.BlockSpec((row_tile, hw_tile), lambda i, j: (i, j)),
                  pl.BlockSpec((row_tile, 1), lambda i, j: (i, 0)),
                  pl.BlockSpec((row_tile, 1), lambda i, j: (i, 0))],
        out_specs=pl.BlockSpec((row_tile, hw_tile), lambda i, j: (i, j)),
        compiler_params=pltpu.CompilerParams(
            dimension_semantics=("parallel", "parallel"),
            vmem_limit_bytes=VMEM_LIMIT_BYTES),
    )(x2p, scale, shift)

    return out2p[:R, :HW].reshape(N, C, H, W)


def reference(x, condition, wg, bg, wb, bb):
    """Pure-JAX reference mirroring the PyTorch forward (training-mode BN)."""
    mean = jnp.mean(x, axis=(0, 2, 3), keepdims=True)
    var = jnp.mean((x - mean) ** 2, axis=(0, 2, 3), keepdims=True)
    xn = (x - mean) / jnp.sqrt(var + EPS)
    gamma = condition @ wg.T + bg
    beta = condition @ wb.T + bb
    return xn + xn * gamma[:, :, None, None] + beta[:, :, None, None]


if __name__ == "__main__":
    # TODO(synk): BatchNorm2d running_mean/var buffer update (training side effect)
    # is not emitted; only the forward output is produced.
    N, C, H, W = 2, 4, 16, 16

    key = jax.random.PRNGKey(0)
    kx, kc, kwg, kbg, kwb, kbb = jax.random.split(key, 6)

    x = jax.random.normal(kx, (N, C, H, W), dtype=jnp.float32)
    condition = jax.random.normal(kc, (N, C), dtype=jnp.float32)

    # Deterministic linear-layer params (PyTorch nn.Linear-style uniform bound)
    bound = 1.0 / jnp.sqrt(jnp.float32(C))
    wg = jax.random.uniform(kwg, (C, C), jnp.float32, -bound, bound)  # (out, in)
    bg = jax.random.uniform(kbg, (C,), jnp.float32, -bound, bound)
    wb = jax.random.uniform(kwb, (C, C), jnp.float32, -bound, bound)
    bb = jax.random.uniform(kbb, (C,), jnp.float32, -bound, bound)

    cbn = jax.jit(conditional_batch_norm_2d)
    out = jax.block_until_ready(cbn(x, condition, wg, bg, wb, bb))

    ref = reference(x, condition, wg, bg, wb, bb)
    assert out.shape == (N, C, H, W)
    assert jnp.allclose(out, ref, atol=1e-4, rtol=1e-4), "mismatch vs reference"

    print("KERNEL_OK")
</pallas_src>

<mosaic_0001>
module attributes {stable_mosaic.version = 11 : i64} {
  func.func @stats_kernel(%arg0: i32, %arg1: i32, %arg2: memref<8x256xf32, #tpu.memory_space<vmem>>, %arg3: memref<8x128xf32, #tpu.memory_space<vmem>>, %arg4: memref<8x128xf32, #tpu.memory_space<vmem>>) attributes {dimension_semantics = [#tpu.dimension_semantics<parallel>, #tpu.dimension_semantics<arbitrary>], iteration_bounds = array<i64: 1, 1>, scalar_prefetch = 0 : i64, scratch_operands = 0 : i64, tpu.core_type = #tpu.core_type<tc>, window_params = [{transform_indices = @transform_0, window_bounds = array<i64: 8, 256>}, {transform_indices = @transform_1, window_bounds = array<i64: 8, 128>}, {transform_indices = @transform_2, window_bounds = array<i64: 8, 128>}]} {
    %c0_i32 = arith.constant 0 : i32
    %0 = arith.cmpi eq, %arg1, %c0_i32 : i32
    %1 = arith.extui %0 : i1 to i32
    %c0_i32_0 = arith.constant 0 : i32
    %2 = arith.cmpi ne, %1, %c0_i32_0 : i32
    scf.if %2 {
      %cst = arith.constant 0.000000e+00 : f32
      %16 = vector.broadcast %cst : f32 to vector<8x128xf32>
      %c0_10 = arith.constant 0 : index
      %c0_11 = arith.constant 0 : index
      %17 = vector.load %arg3[%c0_10, %c0_11] : memref<8x128xf32, #tpu.memory_space<vmem>>, vector<8x128xf32>
      tpu.vector_store %arg3[%c0_10, %c0_11], %16 {strides = array<i32>} : memref<8x128xf32, #tpu.memory_space<vmem>>, vector<8x128xf32>,
      %cst_12 = arith.constant 0.000000e+00 : f32
      %18 = vector.broadcast %cst_12 : f32 to vector<8x128xf32>
      %c0_13 = arith.constant 0 : index
      %c0_14 = arith.constant 0 : index
      %19 = vector.load %arg4[%c0_13, %c0_14] : memref<8x128xf32, #tpu.memory_space<vmem>>, vector<8x128xf32>
      tpu.vector_store %arg4[%c0_13, %c0_14], %18 {strides = array<i32>} : memref<8x128xf32, #tpu.memory_space<vmem>>, vector<8x128xf32>,
    } else {
    }
    %c0 = arith.constant 0 : index
    %c0_1 = arith.constant 0 : index
    %3 = vector.load %arg2[%c0, %c0_1] : memref<8x256xf32, #tpu.memory_space<vmem>>, vector<8x256xf32>
    %c0_2 = arith.constant 0 : index
    %c0_3 = arith.constant 0 : index
    %4 = vector.load %arg3[%c0_2, %c0_3] : memref<8x128xf32, #tpu.memory_space<vmem>>, vector<8x128xf32>
    %c0_4 = arith.constant 0 : index
    %c0_5 = arith.constant 0 : index
    %5 = vector.load %arg4[%c0_4, %c0_5] : memref<8x128xf32, #tpu.memory_space<vmem>>, vector<8x128xf32>
    %6 = vector.extract_strided_slice %3 {offsets = [0, 0], sizes = [8, 128], strides = [1, 1]} : vector<8x256xf32> to vector<8x128xf32>
    %7 = arith.addf %4, %6 : vector<8x128xf32>
    %8 = arith.mulf %6, %6 : vector<8x128xf32>
    %9 = arith.addf %5, %8 : vector<8x128xf32>
    %10 = vector.extract_strided_slice %3 {offsets = [0, 128], sizes = [8, 128], strides = [1, 1]} : vector<8x256xf32> to vector<8x128xf32>
    %11 = arith.addf %7, %10 : vector<8x128xf32>
    %12 = arith.mulf %10, %10 : vector<8x128xf32>
    %13 = arith.addf %9, %12 : vector<8x128xf32>
    %c0_6 = arith.constant 0 : index
    %c0_7 = arith.constant 0 : index
    %14 = vector.load %arg3[%c0_6, %c0_7] : memref<8x128xf32, #tpu.memory_space<vmem>>, vector<8x128xf32>
    tpu.vector_store %arg3[%c0_6, %c0_7], %11 {strides = array<i32>} : memref<8x128xf32, #tpu.memory_space<vmem>>, vector<8x128xf32>,
    %c0_8 = arith.constant 0 : index
    %c0_9 = arith.constant 0 : index
    %15 = vector.load %arg4[%c0_8, %c0_9] : memref<8x128xf32, #tpu.memory_space<vmem>>, vector<8x128xf32>
    tpu.vector_store %arg4[%c0_8, %c0_9], %13 {strides = array<i32>} : memref<8x128xf32, #tpu.memory_space<vmem>>, vector<8x128xf32>,
    return
  }
  func.func @transform_0(%arg0: i32, %arg1: i32) -> (i32, i32) {
    %c0_i32 = arith.constant 0 : i32
    return %arg0, %arg1 : i32, i32
  }
  func.func @transform_1(%arg0: i32, %arg1: i32) -> (i32, i32) {
    %c0_i32 = arith.constant 0 : i32
    %c0_i32_0 = arith.constant 0 : i32
    return %arg0, %c0_i32 : i32, i32
  }
  func.func @transform_2(%arg0: i32, %arg1: i32) -> (i32, i32) {
    %c0_i32 = arith.constant 0 : i32
    %c0_i32_0 = arith.constant 0 : i32
    return %arg0, %c0_i32 : i32, i32
  }
}

module attributes {stable_mosaic.version = 11 : i64} {
  func.func @apply_kernel(%arg0: i32, %arg1: i32, %arg2: memref<8x256xf32, #tpu.memory_space<vmem>>, %arg3: memref<8x1xf32, #tpu.memory_space<vmem>>, %arg4: memref<8x1xf32, #tpu.memory_space<vmem>>, %arg5: memref<8x256xf32, #tpu.memory_space<vmem>>) attributes {dimension_semantics = [#tpu.dimension_semantics<parallel>, #tpu.dimension_semantics<parallel>], iteration_bounds = array<i64: 1, 1>, scalar_prefetch = 0 : i64, scratch_operands = 0 : i64, tpu.core_type = #tpu.core_type<tc>, window_params = [{transform_indices = @transform_0, window_bounds = array<i64: 8, 256>}, {transform_indices = @transform_1, window_bounds = array<i64: 8, 1>}, {transform_indices = @transform_2, window_bounds = array<i64: 8, 1>}, {transform_indices = @transform_3, window_bounds = array<i64: 8, 256>}]} {
    %c0 = arith.constant 0 : index
    %c0_0 = arith.constant 0 : index
    %0 = vector.load %arg2[%c0, %c0_0] : memref<8x256xf32, #tpu.memory_space<vmem>>, vector<8x256xf32>
    %c0_1 = arith.constant 0 : index
    %c0_2 = arith.constant 0 : index
    %1 = vector.load %arg3[%c0_1, %c0_2] : memref<8x1xf32, #tpu.memory_space<vmem>>, vector<8x1xf32>
    %2 = vector.broadcast %1 : vector<8x1xf32> to vector<8x256xf32>
    %3 = arith.mulf %0, %2 : vector<8x256xf32>
    %c0_3 = arith.constant 0 : index
    %c0_4 = arith.constant 0 : index
    %4 = vector.load %arg4[%c0_3, %c0_4] : memref<8x1xf32, #tpu.memory_space<vmem>>, vector<8x1xf32>
    %5 = vector.broadcast %4 : vector<8x1xf32> to vector<8x256xf32>
    %6 = arith.addf %3, %5 : vector<8x256xf32>
    %c0_5 = arith.constant 0 : index
    %c0_6 = arith.constant 0 : index
    %7 = vector.load %arg5[%c0_5, %c0_6] : memref<8x256xf32, #tpu.memory_space<vmem>>, vector<8x256xf32>
    tpu.vector_store %arg5[%c0_5, %c0_6], %6 {strides = array<i32>} : memref<8x256xf32, #tpu.memory_space<vmem>>, vector<8x256xf32>,
    return
  }
  func.func @transform_0(%arg0: i32, %arg1: i32) -> (i32, i32) {
    %c0_i32 = arith.constant 0 : i32
    return %arg0, %arg1 : i32, i32
  }
  func.func @transform_1(%arg0: i32, %arg1: i32) -> (i32, i32) {
    %c0_i32 = arith.constant 0 : i32
    %c0_i32_0 = arith.constant 0 : i32
    return %arg0, %c0_i32 : i32, i32
  }
  func.func @transform_2(%arg0: i32, %arg1: i32) -> (i32, i32) {
    %c0_i32 = arith.constant 0 : i32
    %c0_i32_0 = arith.constant 0 : i32
    return %arg0, %c0_i32 : i32, i32
  }
  func.func @transform_3(%arg0: i32, %arg1: i32) -> (i32, i32) {
    %c0_i32 = arith.constant 0 : i32
    return %arg0, %arg1 : i32, i32
  }
}

</mosaic_0001>

<llo_original>
// kernel: conditional_batch_norm_2d.2
$region0: #{conditional_batch_norm_2d.2}
  #allocation0 [shape = 'u32[]', space=smem, size = 0x4, offset = 0x4, fixed_abs, tag = 'smem constant byte address 0x4 - core index']
  #allocation1 [shape = 'u32[144,128]{1,0:T(1,128)}', space=vmem, size = 0x12000, scoped, tag = 'internal scratch']
  %s0 = inlined_call_operand.vmem [shape: f32[8,256], index: 0, kind: input, shape index: {}]
  %s1 = inlined_call_operand.vmem [shape: f32[8,128], index: 1, kind: output, shape index: {0}]
  %s2 = inlined_call_operand.vmem [shape: f32[8,128], index: 2, kind: output, shape index: {1}]
  %3 = xla_tuple %s1, %s2
  %s4 = sld [smem:[#allocation0]]
  $region26: #{conditional_batch_norm_2d.2} parent=0
    _
  %s6 = ssub.s32 1, %s4
  %s7 = scalar_select 0, %s6, %s4
  // Predicated region
  $region2: #{conditional_batch_norm_2d.2} parent=0 // pred_check
    _
  $region3: #{conditional_batch_norm_2d.2} parent=0 // pred_check_branch
    %9 = sbr.rel (0) target = $region5
  $region4: #{conditional_batch_norm_2d.2} parent=0 // pred_region
    _
  $region5: #{conditional_batch_norm_2d.2} parent=0 // pred_fallthru
    _
  %p10 = scmp.eq.s32.totalorder 0, 0
  // Predicated region
  $region6: #{conditional_batch_norm_2d.2} parent=0 // pred_check
    %p11 = pneg %p10
  $region7: #{conditional_batch_norm_2d.2} parent=0 // pred_check_branch
    %13 = sbr.rel (%p11) target = $region9
  $region8: #{conditional_batch_norm_2d.2} parent=0 // pred_region
    %14 = vst [vmem:[%s1] sm:$0xff] 0.0
    %15 = vst [vmem:[%s2] sm:$0xff] 0.0
  $region9: #{conditional_batch_norm_2d.2} parent=0 // pred_fallthru
    _
  %v16 = vld [vmem:[%s0] sm:$0xff]
  %v17 = vld [vmem:[%s0 + $0x8] sm:$0xff]
  %v18 = vld [vmem:[%s1] sm:$0xff]
  %v19 = vld [vmem:[%s2] sm:$0xff]
  %v20 = vadd.f32 %v18, %v16
  %v21 = vmul.f32 %v16, %v16
  %v22 = vadd.f32 %v19, %v21
  %v23 = vadd.f32 %v20, %v17
  %v24 = vmul.f32 %v17, %v17
  %v25 = vadd.f32 %v22, %v24
  %26 = vst [vmem:[%s1] sm:$0xff] %v23
  %27 = vst [vmem:[%s2] sm:$0xff] %v25
  // Predicated region
  $region10: #{conditional_batch_norm_2d.2} parent=0 // pred_check
    _
  $region11: #{conditional_batch_norm_2d.2} parent=0 // pred_check_branch
    %29 = sbr.rel (0) target = $region13
  $region12: #{conditional_batch_norm_2d.2} parent=0 // pred_region
    _
  $region13: #{conditional_batch_norm_2d.2} parent=0 // pred_fallthru
    _
  // Predicated region
  $region14: #{conditional_batch_norm_2d.2} parent=0 // pred_check
    _
  $region15: #{conditional_batch_norm_2d.2} parent=0 // pred_check_branch
    %31 = sbr.rel (0) target = $region17
  $region16: #{conditional_batch_norm_2d.2} parent=0 // pred_region
    _
  $region17: #{conditional_batch_norm_2d.2} parent=0 // pred_fallthru
    _
  // Predicated region
  $region18: #{conditional_batch_norm_2d.2} parent=0 // pred_check
    _
  $region19: #{conditional_batch_norm_2d.2} parent=0 // pred_check_branch
    %33 = sbr.rel (0) target = $region21
  $region20: #{conditional_batch_norm_2d.2} parent=0 // pred_region
    _
  $region21: #{conditional_batch_norm_2d.2} parent=0 // pred_fallthru
    _
  // Predicated region
  $region22: #{conditional_batch_norm_2d.2} parent=0 // pred_check
    _
  $region23: #{conditional_batch_norm_2d.2} parent=0 // pred_check_branch
    %35 = sbr.rel (0) target = $region25
  $region24: #{conditional_batch_norm_2d.2} parent=0 // pred_region
    _
  $region25: #{conditional_batch_norm_2d.2} parent=0 // pred_fallthru
    _

// kernel: conditional_batch_norm_2d.3
$region0: #{conditional_batch_norm_2d.3}
  #allocation0 [shape = 'u32[]', space=smem, size = 0x4, offset = 0x4, fixed_abs, tag = 'smem constant byte address 0x4 - core index']
  #allocation1 [shape = 'u32[144,128]{1,0:T(1,128)}', space=vmem, size = 0x12000, scoped, tag = 'internal scratch']
  %s0 = inlined_call_operand.vmem [shape: f32[8,256], index: 0, kind: input, shape index: {}]
  %s1 = inlined_call_operand.vmem [shape: f32[8,1], index: 1, kind: input, shape index: {}]
  %s2 = inlined_call_operand.vmem [shape: f32[8,1], index: 2, kind: input, shape index: {}]
  %s3 = inlined_call_operand.vmem [shape: f32[8,256], index: 3, kind: output, shape index: {}]
  %s4 = sld [smem:[#allocation0]]
  $region22: #{conditional_batch_norm_2d.3} parent=0
    _
  %s6 = ssub.s32 1, %s4
  %s7 = scalar_select 0, %s6, %s4
  // Predicated region
  $region2: #{conditional_batch_norm_2d.3} parent=0 // pred_check
    _
  $region3: #{conditional_batch_norm_2d.3} parent=0 // pred_check_branch
    %9 = sbr.rel (0) target = $region5
  $region4: #{conditional_batch_norm_2d.3} parent=0 // pred_region
    _
  $region5: #{conditional_batch_norm_2d.3} parent=0 // pred_fallthru
    _
  // Predicated region
  $region6: #{conditional_batch_norm_2d.3} parent=0 // pred_check
    _
  $region7: #{conditional_batch_norm_2d.3} parent=0 // pred_check_branch
    %11 = sbr.rel (0) target = $region9
  $region8: #{conditional_batch_norm_2d.3} parent=0 // pred_region
    _
  $region9: #{conditional_batch_norm_2d.3} parent=0 // pred_fallthru
    _
  // Predicated region
  $region10: #{conditional_batch_norm_2d.3} parent=0 // pred_check
    _
  $region11: #{conditional_batch_norm_2d.3} parent=0 // pred_check_branch
    %13 = sbr.rel (0) target = $region13
  $region12: #{conditional_batch_norm_2d.3} parent=0 // pred_region
    _
  $region13: #{conditional_batch_norm_2d.3} parent=0 // pred_fallthru
    _
  %v14 = vld [vmem:[%s0] sm:$0xff]
  %v15 = vld [vmem:[%s0 + $0x8] sm:$0xff]
  %v16 = vld [vmem:[%s1] sm:$0xff]
  %18 = vset.pattern.permute.xlu0 0
  %19 = vperm.xlu0 %18, %v16
  %v20 = vpop.permute.xlu0 %19
  %v22 = vmul.f32 %v14, %v20
  %v23 = vmul.f32 %v15, %v20
  %v24 = vld [vmem:[%s2] sm:$0xff]
  %26 = vset.pattern.permute.xlu0 0
  %27 = vperm.xlu0 %26, %v24
  %v28 = vpop.permute.xlu0 %27
  %v30 = vadd.f32 %v22, %v28
  %v31 = vadd.f32 %v23, %v28
  %32 = vst [vmem:[%s3] sm:$0xff] %v30
  %33 = vst [vmem:[%s3 + $0x8] sm:$0xff] %v31
  // Predicated region
  $region14: #{conditional_batch_norm_2d.3} parent=0 // pred_check
    _
  $region15: #{conditional_batch_norm_2d.3} parent=0 // pred_check_branch
    %35 = sbr.rel (0) target = $region17
  $region16: #{conditional_batch_norm_2d.3} parent=0 // pred_region
    _
  $region17: #{conditional_batch_norm_2d.3} parent=0 // pred_fallthru
    _
  // Predicated region
  $region18: #{conditional_batch_norm_2d.3} parent=0 // pred_check
    _
  $region19: #{conditional_batch_norm_2d.3} parent=0 // pred_check_branch
    %37 = sbr.rel (0) target = $region21
  $region20: #{conditional_batch_norm_2d.3} parent=0 // pred_region
    _
  $region21: #{conditional_batch_norm_2d.3} parent=0 // pred_fallthru
    _

</llo_original>
